<compile_context>
chip_gen: v7x
topology: tpu7x:2x2x1
jax: 0.10.0
libtpu: 0.0.40
codegen_flags: <defaults>
</compile_context>

<pallas_src>
import numpy as np

import jax
import jax.numpy as jnp
from jax.experimental import pallas as pl
from jax.experimental.pallas import tpu as pltpu


# ---------------------------------------------------------------------------
# Parameter construction (deterministic, mirrors kornia get_gaussian_kernel2d)
# ---------------------------------------------------------------------------
def _big_odd(val: float) -> int:
    v = max(6, int(val * 6))
    return v + (1 - v % 2)


def _gaussian_1d(ksize: int, sigma: float) -> np.ndarray:
    x = np.arange(ksize, dtype=np.float64) - (ksize - 1) / 2.0
    g = np.exp(-(x ** 2) / (2.0 * float(sigma) ** 2))
    return (g / g.sum()).astype(np.float32)


def _reflect_index(idx: int, n: int) -> int:
    if n == 1:
        return 0
    period = 2 * (n - 1)
    idx = idx % period
    if idx >= n:
        idx = period - idx
    return idx


def _band_matrix(n: int, sigma: float, border_type: str) -> np.ndarray:
    """A (n, n) so that (A @ v)[i] == sum_t g[t] * v[pad_index(i + t - p)].

    Border handling (replicate / reflect / circular / constant) is folded into the
    edge rows, so no padded intermediate tensor is ever materialized.
    """
    k = _big_odd(sigma)
    g = _gaussian_1d(k, sigma)
    p = (k - 1) // 2
    a = np.zeros((n, n), np.float64)
    for i in range(n):
        for t in range(k):
            src = i + t - p
            if border_type == "replicate":
                src = min(max(src, 0), n - 1)
            elif border_type == "constant":
                if src < 0 or src >= n:
                    continue
            elif border_type == "circular":
                src %= n
            elif border_type == "reflect":
                src = _reflect_index(src, n)
            else:
                raise ValueError(f"Unsupported border_type: {border_type}")
            a[i, src] += float(g[t])
    return a.astype(np.float32)


# ---------------------------------------------------------------------------
# Pallas kernel: separable Gaussian blur as two MXU matmul passes per block
# ---------------------------------------------------------------------------
def _separable_blur_kernel(ah_ref, awt_ref, x_ref, out_ref):
    # ah_ref : (H, H)      f32 VMEM  — vertical band matrix A_h (padding folded in)
    # awt_ref: (W, W)      f32 VMEM  — horizontal band matrix, already transposed (A_w^T)
    # x_ref  : (BLK, H, W) VMEM      — BLK images of the flattened (B*C, H, W) input
    # out_ref: (BLK, H, W) VMEM
    blk, h, w = x_ref.shape
    ah = ah_ref[...]
    awt = awt_ref[...]
    # Single upfront cast (important on v5e where the VPU has no bf16 ALU).
    x = x_ref[...].astype(jnp.float32)

    # Horizontal pass: every row of every image in the block through A_w^T.
    # One large (BLK*H, W) @ (W, W) MXU matmul (leading-dim merge is layout-free).
    t = jnp.dot(x.reshape(blk * h, w), awt, preferred_element_type=jnp.float32)

    # Vertical pass: per-image (H, H) @ (H, W) MXU matmul.  blk is a small static
    # constant, so this unrolls into a handful of matmuls (no scalar taps, no slices
    # that cross lane boundaries).
    for b in range(blk):
        y = jnp.dot(ah, t[b * h:(b + 1) * h, :], preferred_element_type=jnp.float32)
        out_ref[b] = y.astype(out_ref.dtype)


def _choose_blk(bc: int, h: int, w: int) -> int:
    """Images per grid step: VMEM-bounded, a divisor of bc, and grid length >= 2."""
    per_img_f32 = h * w * 4
    vmem_cap = max(1, (2 * 1024 * 1024) // per_img_f32)  # ~2 MiB of f32 work per step
    blk = min(bc, vmem_cap, 32)                           # 32 also caps unroll length
    while bc % blk != 0:
        blk -= 1
    if bc // blk < 2:  # keep >=2 grid steps so the parallel axis can span 2 TCs (v7x)
        for cand in range(blk - 1, 0, -1):
            if bc % cand == 0 and bc // cand >= 2:
                blk = cand
                break
    return blk


def gaussian_rkhs_2d(x: jnp.ndarray, sigma, border_type: str = "replicate"):
    """Equivalent of GaussianRKHS(sigma, border_type)(x) for a 4D NCHW input."""
    if x.ndim != 4:
        raise ValueError(f"Expected (B, C, H, W) input, got shape {x.shape}")
    if len(sigma) != 2:
        # TODO(synk): 3D (B,C,D,H,W) branch of GaussianRKHS (fft_filter) not implemented.
        raise NotImplementedError("Only the 2D sigma path is implemented.")
    if border_type not in ("replicate", "reflect", "constant", "circular"):
        raise ValueError(f"Invalid border_type: {border_type}")

    B, C, H, W = x.shape
    # Band matrices built at trace time (sigma static); padding folded into edges.
    a_h = jnp.asarray(_band_matrix(H, float(sigma[0]), border_type))            # (H, H)
    a_wt = jnp.asarray(np.ascontiguousarray(
        _band_matrix(W, float(sigma[1]), border_type).T))                        # (W, W)

    xf = x.reshape(B * C, H, W)   # free reshape (leading-dim merge), no HBM copy
    BC = B * C
    BLK = _choose_blk(BC, H, W)
    grid = (BC // BLK,)

    out = pl.pallas_call(
        _separable_blur_kernel,
        out_shape=jax.ShapeDtypeStruct((BC, H, W), x.dtype),
        grid=grid,
        in_specs=[
            pl.BlockSpec((H, H), lambda i: (0, 0)),            # A_h   (resident)
            pl.BlockSpec((W, W), lambda i: (0, 0)),            # A_w^T (resident)
            pl.BlockSpec((BLK, H, W), lambda i: (i, 0, 0)),    # BLK images per step
        ],
        out_specs=pl.BlockSpec((BLK, H, W), lambda i: (i, 0, 0)),
        compiler_params=pltpu.CompilerParams(
            dimension_semantics=("parallel",),
            # Safe on all generations: well under v7x's 64 MiB physical VMEM,
            # above the 16/32 MiB scoped defaults on v5e/v6e.
            vmem_limit_bytes=48 * 1024 * 1024,
        ),
    )(a_h, a_wt, xf)

    return out.reshape(B, C, H, W)


# ---------------------------------------------------------------------------
# Pure-JAX reference (pad + 49 shifted taps) for an independent correctness check
# ---------------------------------------------------------------------------
_BORDER_TO_JNP_PAD = {
    "replicate": "edge",
    "reflect": "reflect",
    "constant": "constant",
    "circular": "wrap",
}


def _reference_2d(x, sigma, border_type="replicate"):
    B, C, H, W = x.shape
    g_h = _gaussian_1d(_big_odd(sigma[0]), sigma[0])
    g_w = _gaussian_1d(_big_odd(sigma[1]), sigma[1])
    gk = np.outer(g_h, g_w).astype(np.float32)
    KH, KW = gk.shape
    ph, pw = (KH - 1) // 2, (KW - 1) // 2
    xf = x.reshape(B * C, H, W).astype(jnp.float32)
    x_pad = jnp.pad(xf, ((0, 0), (ph, ph), (pw, pw)),
                    mode=_BORDER_TO_JNP_PAD[border_type])
    acc = jnp.zeros((B * C, H, W), jnp.float32)
    for kh in range(KH):
        for kw in range(KW):
            acc = acc + float(gk[kh, kw]) * x_pad[:, kh:kh + H, kw:kw + W]
    return acc.reshape(B, C, H, W).astype(x.dtype)


if __name__ == "__main__":
    # NCHW input, sigma of length 2 -> 2D Gaussian blur with a (7, 7) kernel.
    key = jax.random.PRNGKey(0)
    x = jax.random.normal(key, (2, 4, 16, 16), dtype=jnp.float32)
    sigma = (1.0, 1.0)

    y = gaussian_rkhs_2d(x, sigma, border_type="replicate")
    y = jax.block_until_ready(y)

    y_ref = _reference_2d(x, sigma, border_type="replicate")
    assert y.shape == x.shape and y.dtype == x.dtype
    # Tolerance leaves headroom for MXU f32 accumulation-order / precision differences;
    # any semantic bug (wrong padding / normalization) is orders of magnitude larger.
    assert jnp.allclose(y, y_ref, rtol=1e-3, atol=1e-3), "mismatch vs reference"

    print("KERNEL_OK")
</pallas_src>

<mosaic_0001>
module attributes {stable_mosaic.version = 11 : i64} {
  func.func @_separable_blur_kernel(%arg0: i32, %arg1: memref<16x16xf32, #tpu.memory_space<vmem>>, %arg2: memref<16x16xf32, #tpu.memory_space<vmem>>, %arg3: memref<4x16x16xf32, #tpu.memory_space<vmem>>, %arg4: memref<4x16x16xf32, #tpu.memory_space<vmem>>) attributes {dimension_semantics = [#tpu.dimension_semantics<parallel>], iteration_bounds = array<i64: 2>, scalar_prefetch = 0 : i64, scratch_operands = 0 : i64, tpu.core_type = #tpu.core_type<tc>, window_params = [{pipeline_mode = #tpu.pipeline_mode<synchronous>, transform_indices = @transform_0, window_bounds = array<i64: 16, 16>}, {pipeline_mode = #tpu.pipeline_mode<synchronous>, transform_indices = @transform_1, window_bounds = array<i64: 16, 16>}, {transform_indices = @transform_2, window_bounds = array<i64: 4, 16, 16>}, {transform_indices = @transform_3, window_bounds = array<i64: 4, 16, 16>}]} {
    %c0 = arith.constant 0 : index
    %c0_0 = arith.constant 0 : index
    %0 = vector.load %arg1[%c0, %c0_0] : memref<16x16xf32, #tpu.memory_space<vmem>>, vector<16x16xf32>
    %c0_1 = arith.constant 0 : index
    %c0_2 = arith.constant 0 : index
    %1 = vector.load %arg2[%c0_1, %c0_2] : memref<16x16xf32, #tpu.memory_space<vmem>>, vector<16x16xf32>
    %c0_3 = arith.constant 0 : index
    %c0_4 = arith.constant 0 : index
    %c0_5 = arith.constant 0 : index
    %2 = vector.load %arg3[%c0_3, %c0_4, %c0_5] : memref<4x16x16xf32, #tpu.memory_space<vmem>>, vector<4x16x16xf32>
    %3 = vector.shape_cast %2 : vector<4x16x16xf32> to vector<64x16xf32>
    %cst = arith.constant dense<0.000000e+00> : vector<64x16xf32>
    %4 = tpu.matmul %3, %1, %cst {dimension_numbers = #tpu.dot_dimension_numbers<[1], [0], [0], [1], [0, 0, 1, 1], [], []>} : vector<64x16xf32>, vector<16x16xf32>, vector<64x16xf32> -> vector<64x16xf32>
    %5 = vector.extract_strided_slice %4 {offsets = [0, 0], sizes = [16, 16], strides = [1, 1]} : vector<64x16xf32> to vector<16x16xf32>
    %cst_6 = arith.constant dense<0.000000e+00> : vector<16x16xf32>
    %6 = tpu.matmul %0, %5, %cst_6 {dimension_numbers = #tpu.dot_dimension_numbers<[1], [0], [0], [1], [0, 0, 1, 1], [], []>} : vector<16x16xf32>, vector<16x16xf32>, vector<16x16xf32> -> vector<16x16xf32>
    %c0_7 = arith.constant 0 : index
    %c0_8 = arith.constant 0 : index
    %c0_9 = arith.constant 0 : index
    %7 = vector.load %arg4[%c0_7, %c0_8, %c0_9] : memref<4x16x16xf32, #tpu.memory_space<vmem>>, vector<1x16x16xf32>
    %8 = vector.shape_cast %7 : vector<1x16x16xf32> to vector<16x16xf32>
    %9 = vector.shape_cast %6 : vector<16x16xf32> to vector<1x16x16xf32>
    tpu.vector_store %arg4[%c0_7, %c0_8, %c0_9], %9 {strides = array<i32>} : memref<4x16x16xf32, #tpu.memory_space<vmem>>, vector<1x16x16xf32>,
    %10 = vector.extract_strided_slice %4 {offsets = [16, 0], sizes = [16, 16], strides = [1, 1]} : vector<64x16xf32> to vector<16x16xf32>
    %cst_10 = arith.constant dense<0.000000e+00> : vector<16x16xf32>
    %11 = tpu.matmul %0, %10, %cst_10 {dimension_numbers = #tpu.dot_dimension_numbers<[1], [0], [0], [1], [0, 0, 1, 1], [], []>} : vector<16x16xf32>, vector<16x16xf32>, vector<16x16xf32> -> vector<16x16xf32>
    %c1 = arith.constant 1 : index
    %c0_11 = arith.constant 0 : index
    %c0_12 = arith.constant 0 : index
    %12 = vector.load %arg4[%c1, %c0_11, %c0_12] : memref<4x16x16xf32, #tpu.memory_space<vmem>>, vector<1x16x16xf32>
    %13 = vector.shape_cast %12 : vector<1x16x16xf32> to vector<16x16xf32>
    %14 = vector.shape_cast %11 : vector<16x16xf32> to vector<1x16x16xf32>
    tpu.vector_store %arg4[%c1, %c0_11, %c0_12], %14 {strides = array<i32>} : memref<4x16x16xf32, #tpu.memory_space<vmem>>, vector<1x16x16xf32>,
    %15 = vector.extract_strided_slice %4 {offsets = [32, 0], sizes = [16, 16], strides = [1, 1]} : vector<64x16xf32> to vector<16x16xf32>
    %cst_13 = arith.constant dense<0.000000e+00> : vector<16x16xf32>
    %16 = tpu.matmul %0, %15, %cst_13 {dimension_numbers = #tpu.dot_dimension_numbers<[1], [0], [0], [1], [0, 0, 1, 1], [], []>} : vector<16x16xf32>, vector<16x16xf32>, vector<16x16xf32> -> vector<16x16xf32>
    %c2 = arith.constant 2 : index
    %c0_14 = arith.constant 0 : index
    %c0_15 = arith.constant 0 : index
    %17 = vector.load %arg4[%c2, %c0_14, %c0_15] : memref<4x16x16xf32, #tpu.memory_space<vmem>>, vector<1x16x16xf32>
    %18 = vector.shape_cast %17 : vector<1x16x16xf32> to vector<16x16xf32>
    %19 = vector.shape_cast %16 : vector<16x16xf32> to vector<1x16x16xf32>
    tpu.vector_store %arg4[%c2, %c0_14, %c0_15], %19 {strides = array<i32>} : memref<4x16x16xf32, #tpu.memory_space<vmem>>, vector<1x16x16xf32>,
    %20 = vector.extract_strided_slice %4 {offsets = [48, 0], sizes = [16, 16], strides = [1, 1]} : vector<64x16xf32> to vector<16x16xf32>
    %cst_16 = arith.constant dense<0.000000e+00> : vector<16x16xf32>
    %21 = tpu.matmul %0, %20, %cst_16 {dimension_numbers = #tpu.dot_dimension_numbers<[1], [0], [0], [1], [0, 0, 1, 1], [], []>} : vector<16x16xf32>, vector<16x16xf32>, vector<16x16xf32> -> vector<16x16xf32>
    %c3 = arith.constant 3 : index
    %c0_17 = arith.constant 0 : index
    %c0_18 = arith.constant 0 : index
    %22 = vector.load %arg4[%c3, %c0_17, %c0_18] : memref<4x16x16xf32, #tpu.memory_space<vmem>>, vector<1x16x16xf32>
    %23 = vector.shape_cast %22 : vector<1x16x16xf32> to vector<16x16xf32>
    %24 = vector.shape_cast %21 : vector<16x16xf32> to vector<1x16x16xf32>
    tpu.vector_store %arg4[%c3, %c0_17, %c0_18], %24 {strides = array<i32>} : memref<4x16x16xf32, #tpu.memory_space<vmem>>, vector<1x16x16xf32>,
    return
  }
  func.func @transform_0(%arg0: i32) -> (i32, i32) {
    %c0_i32 = arith.constant 0 : i32
    %c0_i32_0 = arith.constant 0 : i32
    %c0_i32_1 = arith.constant 0 : i32
    return %c0_i32, %c0_i32_0 : i32, i32
  }
  func.func @transform_1(%arg0: i32) -> (i32, i32) {
    %c0_i32 = arith.constant 0 : i32
    %c0_i32_0 = arith.constant 0 : i32
    %c0_i32_1 = arith.constant 0 : i32
    return %c0_i32, %c0_i32_0 : i32, i32
  }
  func.func @transform_2(%arg0: i32) -> (i32, i32, i32) {
    %c0_i32 = arith.constant 0 : i32
    %c0_i32_0 = arith.constant 0 : i32
    %c0_i32_1 = arith.constant 0 : i32
    return %arg0, %c0_i32, %c0_i32_0 : i32, i32, i32
  }
  func.func @transform_3(%arg0: i32) -> (i32, i32, i32) {
    %c0_i32 = arith.constant 0 : i32
    %c0_i32_0 = arith.constant 0 : i32
    %c0_i32_1 = arith.constant 0 : i32
    return %arg0, %c0_i32, %c0_i32_0 : i32, i32, i32
  }
}

</mosaic_0001>

<llo_original>
// kernel: tpu_custom_call.1
$region0: #{tpu_custom_call.1}
  #allocation0 [shape = 'u32[]', space=smem, size = 0x4, offset = 0x4, fixed_abs, tag = 'smem constant byte address 0x4 - core index']
  #allocation1 [shape = 'u32[144,128]{1,0:T(1,128)}', space=vmem, size = 0x12000, scoped, tag = 'internal scratch']
  %s0 = inlined_call_operand.hbm [shape: f32[16,16], index: 0, kind: input, shape index: {}]
  %s1 = inlined_call_operand.hbm [shape: f32[16,16], index: 1, kind: input, shape index: {}]
  %s2 = inlined_call_operand.hbm [shape: f32[8,16,16], index: 2, kind: input, shape index: {}]
  %s3 = inlined_call_operand.hbm [shape: f32[8,16,16], index: 3, kind: output, shape index: {}]
  %s4 = sld [smem:[#allocation0]]
  $region57: #{tpu_custom_call.1} parent=0
    _
  %s6 = ssub.s32 1, %s4
  %s7 = scalar_select 0, %s6, %s4
  $region1: #{tpu_custom_call.1} parent=0
    #allocation2 [shape = 'u8[8192]{0}', space=vmem, size = 0x2000, scoped, tag = 'input window, operand 0, single buffered']
    #allocation3 [shape = 's32[2]{0}', space=sflag, size = 0x8, scoped, tag = 'scoped memory for tpu_custom_call.1']
    #allocation4 [shape = 's32[2]{0}', space=sflag, size = 0x8, scoped, tag = 'scoped memory for tpu_custom_call.1']
    #allocation5 [shape = 'u8[8192]{0}', space=vmem, size = 0x2000, scoped, tag = 'input window, operand 1, single buffered']
    #allocation6 [shape = 's32[1]{0}', space=sflag, size = 0x4, scoped, tag = 'scoped memory for tpu_custom_call.1']
    #allocation7 [shape = 'u8[65536]{0}', space=vmem, size = 0x10000, scoped, tag = 'input window, operand 2']
    #allocation8 [shape = 'u8[65536]{0}', space=vmem, size = 0x10000, scoped, tag = 'output window, operand 0']
    %8 = vsyncpa [#allocation3], 0
    %9 = vsyncpa [#allocation6], 0
    %10 = vsyncpa [#allocation4], 0
    %s11 = scalar_lea.sflag [#allocation4], 1
    %12 = vsyncpa %s11, 0
    loop: start=0, step=1, limit=4
    $region2: #{tpu_custom_call.1} parent=1 // loop_pre_header
      _
    $region3: #{tpu_custom_call.1} parent=1 // loop_header
      %s14 = sphi 0, %s18
      %p15 = scmp.ge.s32.totalorder %s14, 4
      %s22 = sphi 0, %s22
      %s24 = sphi 0, %s22
      %s25 = sphi 0, %s24
      %s39 = sphi 0, %s25
      %s43 = sphi 0, %s43
      %s45 = sphi 0, %s43
      %s46 = sphi 0, %s45
      %s60 = sphi 0, %s46
      %s66 = sphi 0, %s68
      %s69 = sphi 0, %s66
      %s70 = sphi 0, %s69
      %s86 = sphi 0, %s70
      %s92 = sphi 0, %s94
      %s95 = sphi 0, %s92
      %s96 = sphi 0, %s95
      %s112 = sphi 0, %s96
    $region4: #{tpu_custom_call.1} parent=1 // loop_header_branch
      %17 = sbr.rel (%p15) target = $region8
    $region5: #{tpu_custom_call.1} parent=1 // loop_body
      %s19 = ssub.s32 %s14, 1
      %s20 = ssub.s32 %s14, 2
      %s21 = sadd.s32 %s14, 1
      %s23 = sadd.s32 %s22, 1
      %p26 = scmp.eq.s32.totalorder %s14, 1
      %p27 = scmp.ne.s32.totalorder %s22, %s24
      %p28 = scmp.eq.s32.totalorder %s14, 0
      %p29 = por %p27, %p28
      %p30 = scmp.ne.s32.totalorder %s22, %s24
      %p31 = scmp.eq.s32.totalorder %s19, 1
      %p32 = por %p30, %p31
      %p33 = scmp.ne.s32.totalorder %s24, %s25
      %p34 = scmp.eq.s32.totalorder %s19, 0
      %p35 = por %p33, %p34
      %p36 = scmp.ne.s32.totalorder %s24, %s25
      %p37 = scmp.eq.s32.totalorder %s20, 1
      %p38 = por %p36, %p37
      %p40 = scmp.ne.s32.totalorder %s25, %s39
      %p41 = scmp.eq.s32.totalorder %s20, 0
      %p42 = por %p40, %p41
      %s44 = sadd.s32 %s43, 1
      %p47 = scmp.eq.s32.totalorder %s14, 1
      %p48 = scmp.ne.s32.totalorder %s43, %s45
      %p49 = scmp.eq.s32.totalorder %s14, 0
      %p50 = por %p48, %p49
      %p51 = scmp.ne.s32.totalorder %s43, %s45
      %p52 = scmp.eq.s32.totalorder %s19, 1
      %p53 = por %p51, %p52
      %p54 = scmp.ne.s32.totalorder %s45, %s46
      %p55 = scmp.eq.s32.totalorder %s19, 0
      %p56 = por %p54, %p55
      %p57 = scmp.ne.s32.totalorder %s45, %s46
      %p58 = scmp.eq.s32.totalorder %s20, 1
      %p59 = por %p57, %p58
      %p61 = scmp.ne.s32.totalorder %s46, %s60
      %p62 = scmp.eq.s32.totalorder %s20, 0
      %p63 = por %p61, %p62
      %s64 = ssub.s32 %s14, %s21
      %p65 = scmp.eq.s32.totalorder %s64, 0
      %s67 = sadd.s32 %s66, 1
      %s68 = scalar_select %p65, %s66, %s67
      %p71 = pneg %p65
      %p72 = scmp.eq.s32.totalorder %s14, 1
      %p73 = por %p71, %p72
      %p74 = scmp.ne.s32.totalorder %s66, %s69
      %p75 = scmp.eq.s32.totalorder %s14, 0
      %p76 = por %p74, %p75
      %p77 = scmp.ne.s32.totalorder %s66, %s69
      %p78 = scmp.eq.s32.totalorder %s19, 1
      %p79 = por %p77, %p78
      %p80 = scmp.ne.s32.totalorder %s69, %s70
      %p81 = scmp.eq.s32.totalorder %s19, 0
      %p82 = por %p80, %p81
      %p83 = scmp.ne.s32.totalorder %s69, %s70
      %p84 = scmp.eq.s32.totalorder %s20, 1
      %p85 = por %p83, %p84
      %p87 = scmp.ne.s32.totalorder %s70, %s86
      %p88 = scmp.eq.s32.totalorder %s20, 0
      %p89 = por %p87, %p88
      %s90 = ssub.s32 %s14, %s21
      %p91 = scmp.eq.s32.totalorder %s90, 0
      %s93 = sadd.s32 %s92, 1
      %s94 = scalar_select %p91, %s92, %s93
      %p97 = pneg %p91
      %p98 = scmp.eq.s32.totalorder %s14, 1
      %p99 = por %p97, %p98
      %p100 = scmp.ne.s32.totalorder %s92, %s95
      %p101 = scmp.eq.s32.totalorder %s14, 0
      %p102 = por %p100, %p101
      %p103 = scmp.ne.s32.totalorder %s92, %s95
      %p104 = scmp.eq.s32.totalorder %s19, 1
      %p105 = por %p103, %p104
      %p106 = scmp.ne.s32.totalorder %s95, %s96
      %p107 = scmp.eq.s32.totalorder %s19, 0
      %p108 = por %p106, %p107
      %p109 = scmp.ne.s32.totalorder %s95, %s96
      %p110 = scmp.eq.s32.totalorder %s20, 1
      %p111 = por %p109, %p110
      %p113 = scmp.ne.s32.totalorder %s96, %s112
      %p114 = scmp.eq.s32.totalorder %s20, 0
      %p115 = por %p113, %p114
      %p116 = scmp.le.s32.totalorder 1, %s14
      %p117 = scmp.lt.s32.totalorder %s14, 3
      %p118 = pnand %p116, %p117
      %p119 = pneg %p118
      // Predicated region
      $region9: #{tpu_custom_call.1} parent=5 // pred_check
        _
      $region10: #{tpu_custom_call.1} parent=5 // pred_check_branch
        %121 = sbr.rel (%p118) target = $region12
      $region11: #{tpu_custom_call.1} parent=5 // pred_region
        %s122 = ssub.s32 %s14, 1
        // Predicated region
        $region13: #{tpu_custom_call.1} parent=11 // pred_check
          %p123 = pneg %p35
        $region14: #{tpu_custom_call.1} parent=11 // pred_check_branch
          %125 = sbr.rel (%p123) target = $region16
        $region15: #{tpu_custom_call.1} parent=11 // pred_region
          %s127 = ssub.s32 256, 256
          %128 = vsyncadd [#allocation3], %s127
          %s129 = sshll.u32 [#allocation2], 4
          %s130 = int_to_ptr.vmem [resolvable:$true] %s129
          %135 = dma.hbm_to_vmem [thread:$0]  %s0, 256, %s130, [#allocation3], 128, 128, 8
        $region16: #{tpu_custom_call.1} parent=11 // pred_fallthru
          _
        // Predicated region
        $region17: #{tpu_custom_call.1} parent=11 // pred_check
          %p136 = pneg %p56
        $region18: #{tpu_custom_call.1} parent=11 // pred_check_branch
          %138 = sbr.rel (%p136) target = $region20
        $region19: #{tpu_custom_call.1} parent=11 // pred_region
          %s140 = ssub.s32 256, 256
          %141 = vsyncadd [#allocation6], %s140
          %s142 = sshll.u32 [#allocation5], 4
          %s143 = int_to_ptr.vmem [resolvable:$true] %s142
          %148 = dma.hbm_to_vmem [thread:$0]  %s1, 256, %s143, [#allocation6], 128, 128, 8
        $region20: #{tpu_custom_call.1} parent=11 // pred_fallthru
          _
      $region12: #{tpu_custom_call.1} parent=5 // pred_fallthru
        _
      %p149 = scmp.lt.s32.totalorder %s14, 2
      // Predicated region
      $region21: #{tpu_custom_call.1} parent=5 // pred_check
        %p150 = pneg %p149
      $region22: #{tpu_custom_call.1} parent=5 // pred_check_branch
        %152 = sbr.rel (%p150) target = $region24
      $region23: #{tpu_custom_call.1} parent=5 // pred_region
        // Predicated region
        $region25: #{tpu_custom_call.1} parent=23 // pred_check
          %p153 = pneg %p76
        $region26: #{tpu_custom_call.1} parent=23 // pred_check_branch
          %155 = sbr.rel (%p153) target = $region28
        $region27: #{tpu_custom_call.1} parent=23 // pred_region
          %s156 = sand.u32 %s14, 1
          %s157 = scalar_lea.sflag [#allocation3], %s156
          %s158 = sand.u32 %s66, 1
          %s159 = smul.addr %s158, 64
          %s160 = scalar_lea.vmem [#allocation7], %s159
          %s161 = smul.u32 4, %s14
          %s163 = ssub.s32 1024, 1024
          %164 = vsyncadd %s157, %s163
          %s165 = smul.addr %s161, 2
          %s166 = smul.addr %s165, 128
          %s167 = scalar_lea.hbm %s2, %s166
          %s168 = sshll.u32 %s160, 4
          %s169 = int_to_ptr.vmem [resolvable:$true] %s168
          %174 = dma.hbm_to_vmem [thread:$0]  %s167, 1024, %s169, %s157, 128, 128, 8
        $region28: #{tpu_custom_call.1} parent=23 // pred_fallthru
          _
      $region24: #{tpu_custom_call.1} parent=5 // pred_fallthru
        _
      %p175 = scmp.le.s32.totalorder 1, %s14
      %p176 = scmp.lt.s32.totalorder %s14, 3
      %p177 = pnand %p175, %p176
      %p178 = pneg %p177
      // Predicated region
      $region29: #{tpu_custom_call.1} parent=5 // pred_check
        _
      $region30: #{tpu_custom_call.1} parent=5 // pred_check_branch
        %180 = sbr.rel (%p177) target = $region32
      $region31: #{tpu_custom_call.1} parent=5 // pred_region
        %s181 = ssub.s32 %s14, 1
        // Predicated region
        $region33: #{tpu_custom_call.1} parent=31 // pred_check
          %p182 = pneg %p35
        $region34: #{tpu_custom_call.1} parent=31 // pred_check_branch
          %184 = sbr.rel (%p182) target = $region36
        $region35: #{tpu_custom_call.1} parent=31 // pred_region
          %185 = dma.done [#allocation3], 256
        $region36: #{tpu_custom_call.1} parent=31 // pred_fallthru
          _
        // Predicated region
        $region37: #{tpu_custom_call.1} parent=31 // pred_check
          %p186 = pneg %p56
        $region38: #{tpu_custom_call.1} parent=31 // pred_check_branch
          %188 = sbr.rel (%p186) target = $region40
        $region39: #{tpu_custom_call.1} parent=31 // pred_region
          %189 = dma.done [#allocation6], 256
        $region40: #{tpu_custom_call.1} parent=31 // pred_fallthru
          _
        %s190 = sand.u32 %s19, 1
        %s191 = scalar_lea.sflag [#allocation3], %s190
        %s192 = sand.u32 %s69, 1
        %s193 = smul.addr %s192, 64
        %s194 = scalar_lea.vmem [#allocation7], %s193
        // Predicated region
        $region41: #{tpu_custom_call.1} parent=31 // pred_check
          %p195 = pneg %p82
        $region42: #{tpu_custom_call.1} parent=31 // pred_check_branch
          %197 = sbr.rel (%p195) target = $region44
        $region43: #{tpu_custom_call.1} parent=31 // pred_region
          %198 = dma.done %s191, 1024
        $region44: #{tpu_custom_call.1} parent=31 // pred_fallthru
          _
        %p199 = pneg %p35
        %p200 = pneg %p32
        %p201 = pneg %p56
        %p202 = pneg %p53
        %s203 = sand.u32 %s19, 1
        %s204 = scalar_lea.sflag [#allocation3], %s203
        %s205 = sand.u32 %s69, 1
        %s206 = smul.addr %s205, 64
        %s207 = scalar_lea.vmem [#allocation7], %s206
        %p208 = pneg %p82
        %p209 = pneg %p79
        %p210 = pneg %p108
        %p211 = pneg %p105
        %s212 = sand.u32 %s95, 1
        %s213 = scalar_lea.sflag [#allocation4], %s212
        %s214 = sand.u32 %s95, 1
        %s215 = smul.addr %s214, 64
        %s216 = scalar_lea.vmem [#allocation8], %s215
        %s217 = smul.u32 4, %s19
        %s218 = smul.u32 4, %s19
        %v219 = vld [vmem:[#allocation2] sm:$0xff]
        %v220 = vld [vmem:[#allocation2 + $0x8] sm:$0xff]
        %v221 = vld [vmem:[#allocation5] sm:$0xff]
        %v222 = vld [vmem:[#allocation5 + $0x8] sm:$0xff]
        %v223 = vld [vmem:[%s194] sm:$0xff]
        %v224 = vld [vmem:[%s194 + $0x8] sm:$0xff]
        %v225 = vld [vmem:[%s194 + $0x10] sm:$0xff]
        %v226 = vld [vmem:[%s194 + $0x18] sm:$0xff]
        %v227 = vld [vmem:[%s194 + $0x20] sm:$0xff]
        %v228 = vld [vmem:[%s194 + $0x28] sm:$0xff]
        %v229 = vld [vmem:[%s194 + $0x30] sm:$0xff]
        %v230 = vld [vmem:[%s194 + $0x38] sm:$0xff]
        %vm231 = vcmask 130048
        %v233 = vsel %vm231, %v223, 0
        %v236 = vsel %vm231, %v224, 0
        %v239 = vsel %vm231, %v225, 0
        %v242 = vsel %vm231, %v226, 0
        %v245 = vsel %vm231, %v227, 0
        %v248 = vsel %vm231, %v228, 0
        %v251 = vsel %vm231, %v229, 0
        %v254 = vsel %vm231, %v230, 0
        %256 = vmatprep.subr.mxu0 0.0
        %257 = vmatpush1.msra.mxu0 %v221
        %258 = vmatprep.subr.mxu0 0.0
        %259 = vmatpush1.msra.mxu0 %v222
        %260 = vmatprep.subr.mxu0 0.0
        %261 = vmatpush1.msra.mxu0 0.0
        %262 = vmatprep.subr.mxu0 0.0
        %263 = vmatpush1.msra.mxu0 0.0
        %264 = vmatprep.subr.mxu0 0.0
        %265 = vmatpush1.msra.mxu0 0.0
        %266 = vmatprep.subr.mxu0 0.0
        %267 = vmatpush1.msra.mxu0 0.0
        %268 = vmatprep.subr.mxu0 0.0
        %269 = vmatpush1.msra.mxu0 0.0
        %270 = vmatprep.subr.mxu0 0.0
        %271 = vmatpush1.msra.mxu0 0.0
        %272 = vmatprep.subr.mxu0 0.0
        %273 = vmatpush1.msra.mxu0 0.0
        %274 = vmatprep.subr.mxu0 0.0
        %275 = vmatpush1.msra.mxu0 0.0
        %276 = vmatprep.subr.mxu0 0.0
        %277 = vmatpush1.msra.mxu0 0.0
        %278 = vmatprep.subr.mxu0 0.0
        %279 = vmatpush1.msra.mxu0 0.0
        %280 = vmatprep.subr.mxu0 0.0
        %281 = vmatpush1.msra.mxu0 0.0
        %282 = vmatprep.subr.mxu0 0.0
        %283 = vmatpush1.msra.mxu0 0.0
        %284 = vmatprep.subr.mxu0 0.0
        %285 = vmatpush1.msra.mxu0 0.0
        %286 = vmatprep.subr.mxu0 0.0
        %287 = vmatpush1.msra.mxu0 0.0
        %288 = vmatprep.subr.mxu0 0.0
        %289 = vmatpush1.msra.mxu0 0.0
        %290 = vmatprep.subr.mxu0 0.0
        %291 = vmatpush1.msra.mxu0 0.0
        %292 = vmatprep.subr.mxu0 0.0
        %293 = vmatpush1.msra.mxu0 0.0
        %294 = vmatprep.subr.mxu0 0.0
        %295 = vmatpush1.msra.mxu0 0.0
        %296 = vmatprep.subr.mxu0 0.0
        %297 = vmatpush1.msra.mxu0 0.0
        %298 = vmatprep.subr.mxu0 0.0
        %299 = vmatpush1.msra.mxu0 0.0
        %300 = vmatprep.subr.mxu0 0.0
        %301 = vmatpush1.msra.mxu0 0.0
        %302 = vmatprep.subr.mxu0 0.0
        %303 = vmatpush1.msra.mxu0 0.0
        %304 = vmatprep.subr.mxu0 0.0
        %305 = vmatpush1.msra.mxu0 0.0
        %306 = vmatprep.subr.mxu0 0.0
        %307 = vmatpush1.msra.mxu0 0.0
        %308 = vmatprep.subr.mxu0 0.0
        %309 = vmatpush1.msra.mxu0 0.0
        %310 = vmatprep.subr.mxu0 0.0
        %311 = vmatpush1.msra.mxu0 0.0
        %312 = vmatprep.subr.mxu0 0.0
        %313 = vmatpush1.msra.mxu0 0.0
        %314 = vmatprep.subr.mxu0 0.0
        %315 = vmatpush1.msra.mxu0 0.0
        %316 = vmatprep.subr.mxu0 0.0
        %317 = vmatpush1.msra.mxu0 0.0
        %318 = vmatprep.subr.mxu0 0.0
        %319 = vmatpush1.msra.mxu0 0.0
        %320 = vmatprep.mubr.f32.mxu0 0.0
        %321 = vmatmul.mubr.f32.gmra.mrb[0].mxu0 %v233
        %v322 = vpop.f32.mrb[0].mxu0
        %v323 = vadd.f32 0.0, %v322
        %v324 = vpop.f32.mrb[0].mxu0
        %325 = vmatprep.mubr.f32.mxu0 0.0
        %326 = vmatmul.mubr.f32.gmra.mrb[0].mxu0 %v236
        %v327 = vpop.f32.mrb[0].mxu0
        %v328 = vadd.f32 0.0, %v327
        %v329 = vpop.f32.mrb[0].mxu0
        %330 = vmatprep.mubr.f32.mxu0 0.0
        %331 = vmatmul.mubr.f32.gmra.mrb[0].mxu0 %v239
        %v332 = vpop.f32.mrb[0].mxu0
        %v333 = vadd.f32 0.0, %v332
        %v334 = vpop.f32.mrb[0].mxu0
        %335 = vmatprep.mubr.f32.mxu0 0.0
        %336 = vmatmul.mubr.f32.gmra.mrb[0].mxu0 %v242
        %v337 = vpop.f32.mrb[0].mxu0
        %v338 = vadd.f32 0.0, %v337
        %v339 = vpop.f32.mrb[0].mxu0
        %340 = vmatprep.mubr.f32.mxu0 0.0
        %341 = vmatmul.mubr.f32.gmra.mrb[0].mxu0 %v245
        %v342 = vpop.f32.mrb[0].mxu0
        %v343 = vadd.f32 0.0, %v342
        %v344 = vpop.f32.mrb[0].mxu0
        %345 = vmatprep.mubr.f32.mxu0 0.0
        %346 = vmatmul.mubr.f32.gmra.mrb[0].mxu0 %v248
        %v347 = vpop.f32.mrb[0].mxu0
        %v348 = vadd.f32 0.0, %v347
        %v349 = vpop.f32.mrb[0].mxu0
        %350 = vmatprep.mubr.f32.mxu0 0.0
        %351 = vmatmul.mubr.f32.gmra.mrb[0].mxu0 %v251
        %v352 = vpop.f32.mrb[0].mxu0
        %v353 = vadd.f32 0.0, %v352
        %v354 = vpop.f32.mrb[0].mxu0
        %355 = vmatprep.mubr.f32.mxu0 0.0
        %356 = vmatmul.mubr.f32.gmra.mrb[0].mxu0 %v254
        %v357 = vpop.f32.mrb[0].mxu0
        %v358 = vadd.f32 0.0, %v357
        %v359 = vpop.f32.mrb[0].mxu0
        %360 = vdwg.mxu0
        %v362 = vsel %vm231, %v219, 0
        %v365 = vsel %vm231, %v220, 0
        %367 = vmatprep.subr.mxu0 0.0
        %368 = vmatpush1.msra.mxu0 %v323
        %369 = vmatprep.subr.mxu0 0.0
        %370 = vmatpush1.msra.mxu0 %v328
        %371 = vmatprep.subr.mxu0 0.0
        %372 = vmatpush1.msra.mxu0 0.0
        %373 = vmatprep.subr.mxu0 0.0
        %374 = vmatpush1.msra.mxu0 0.0
        %375 = vmatprep.subr.mxu0 0.0
        %376 = vmatpush1.msra.mxu0 0.0
        %377 = vmatprep.subr.mxu0 0.0
        %378 = vmatpush1.msra.mxu0 0.0
        %379 = vmatprep.subr.mxu0 0.0
        %380 = vmatpush1.msra.mxu0 0.0
        %381 = vmatprep.subr.mxu0 0.0
        %382 = vmatpush1.msra.mxu0 0.0
        %383 = vmatprep.subr.mxu0 0.0
        %384 = vmatpush1.msra.mxu0 0.0
        %385 = vmatprep.subr.mxu0 0.0
        %386 = vmatpush1.msra.mxu0 0.0
        %387 = vmatprep.subr.mxu0 0.0
        %388 = vmatpush1.msra.mxu0 0.0
        %389 = vmatprep.subr.mxu0 0.0
        %390 = vmatpush1.msra.mxu0 0.0
        %391 = vmatprep.subr.mxu0 0.0
        %392 = vmatpush1.msra.mxu0 0.0
        %393 = vmatprep.subr.mxu0 0.0
        %394 = vmatpush1.msra.mxu0 0.0
        %395 = vmatprep.subr.mxu0 0.0
        %396 = vmatpush1.msra.mxu0 0.0
        %397 = vmatprep.subr.mxu0 0.0
        %398 = vmatpush1.msra.mxu0 0.0
        %399 = vmatprep.subr.mxu0 0.0
        %400 = vmatpush1.msra.mxu0 0.0
        %401 = vmatprep.subr.mxu0 0.0
        %402 = vmatpush1.msra.mxu0 0.0
        %403 = vmatprep.subr.mxu0 0.0
        %404 = vmatpush1.msra.mxu0 0.0
        %405 = vmatprep.subr.mxu0 0.0
        %406 = vmatpush1.msra.mxu0 0.0
        %407 = vmatprep.subr.mxu0 0.0
        %408 = vmatpush1.msra.mxu0 0.0
        %409 = vmatprep.subr.mxu0 0.0
        %410 = vmatpush1.msra.mxu0 0.0
        %411 = vmatprep.subr.mxu0 0.0
        %412 = vmatpush1.msra.mxu0 0.0
        %413 = vmatprep.subr.mxu0 0.0
        %414 = vmatpush1.msra.mxu0 0.0
        %415 = vmatprep.subr.mxu0 0.0
        %416 = vmatpush1.msra.mxu0 0.0
        %417 = vmatprep.subr.mxu0 0.0
        %418 = vmatpush1.msra.mxu0 0.0
        %419 = vmatprep.subr.mxu0 0.0
        %420 = vmatpush1.msra.mxu0 0.0
        %421 = vmatprep.subr.mxu0 0.0
        %422 = vmatpush1.msra.mxu0 0.0
        %423 = vmatprep.subr.mxu0 0.0
        %424 = vmatpush1.msra.mxu0 0.0
        %425 = vmatprep.subr.mxu0 0.0
        %426 = vmatpush1.msra.mxu0 0.0
        %427 = vmatprep.subr.mxu0 0.0
        %428 = vmatpush1.msra.mxu0 0.0
        %429 = vmatprep.subr.mxu0 0.0
        %430 = vmatpush1.msra.mxu0 0.0
        %431 = vmatprep.mubr.f32.mxu0 0.0
        %432 = vmatmul.mubr.f32.gmra.mrb[0].mxu0 %v362
        %v433 = vpop.f32.mrb[0].mxu0
        %v434 = vadd.f32 0.0, %v433
        %v435 = vpop.f32.mrb[0].mxu0
        %436 = vmatprep.mubr.f32.mxu0 0.0
        %437 = vmatmul.mubr.f32.gmra.mrb[0].mxu0 %v365
        %v438 = vpop.f32.mrb[0].mxu0
        %v439 = vadd.f32 0.0, %v438
        %v440 = vpop.f32.mrb[0].mxu0
        %441 = vdwg.mxu0
        %442 = vst.msk [vmem:[%s216] sm:$0xff] %vm231, %v434
        %443 = vst.msk [vmem:[%s216 + $0x8] sm:$0xff] %vm231, %v439
        %444 = vmatprep.subr.mxu0 0.0
        %445 = vmatpush1.msra.mxu0 %v333
        %446 = vmatprep.subr.mxu0 0.0
        %447 = vmatpush1.msra.mxu0 %v338
        %448 = vmatprep.subr.mxu0 0.0
        %449 = vmatpush1.msra.mxu0 0.0
        %450 = vmatprep.subr.mxu0 0.0
        %451 = vmatpush1.msra.mxu0 0.0
        %452 = vmatprep.subr.mxu0 0.0
        %453 = vmatpush1.msra.mxu0 0.0
        %454 = vmatprep.subr.mxu0 0.0
        %455 = vmatpush1.msra.mxu0 0.0
        %456 = vmatprep.subr.mxu0 0.0
        %457 = vmatpush1.msra.mxu0 0.0
        %458 = vmatprep.subr.mxu0 0.0
        %459 = vmatpush1.msra.mxu0 0.0
        %460 = vmatprep.subr.mxu0 0.0
        %461 = vmatpush1.msra.mxu0 0.0
        %462 = vmatprep.subr.mxu0 0.0
        %463 = vmatpush1.msra.mxu0 0.0
        %464 = vmatprep.subr.mxu0 0.0
        %465 = vmatpush1.msra.mxu0 0.0
        %466 = vmatprep.subr.mxu0 0.0
        %467 = vmatpush1.msra.mxu0 0.0
        %468 = vmatprep.subr.mxu0 0.0
        %469 = vmatpush1.msra.mxu0 0.0
        %470 = vmatprep.subr.mxu0 0.0
        %471 = vmatpush1.msra.mxu0 0.0
        %472 = vmatprep.subr.mxu0 0.0
        %473 = vmatpush1.msra.mxu0 0.0
        %474 = vmatprep.subr.mxu0 0.0
        %475 = vmatpush1.msra.mxu0 0.0
        %476 = vmatprep.subr.mxu0 0.0
        %477 = vmatpush1.msra.mxu0 0.0
        %478 = vmatprep.subr.mxu0 0.0
        %479 = vmatpush1.msra.mxu0 0.0
        %480 = vmatprep.subr.mxu0 0.0
        %481 = vmatpush1.msra.mxu0 0.0
        %482 = vmatprep.subr.mxu0 0.0
        %483 = vmatpush1.msra.mxu0 0.0
        %484 = vmatprep.subr.mxu0 0.0
        %485 = vmatpush1.msra.mxu0 0.0
        %486 = vmatprep.subr.mxu0 0.0
        %487 = vmatpush1.msra.mxu0 0.0
        %488 = vmatprep.subr.mxu0 0.0
        %489 = vmatpush1.msra.mxu0 0.0
        %490 = vmatprep.subr.mxu0 0.0
        %491 = vmatpush1.msra.mxu0 0.0
        %492 = vmatprep.subr.mxu0 0.0
        %493 = vmatpush1.msra.mxu0 0.0
        %494 = vmatprep.subr.mxu0 0.0
        %495 = vmatpush1.msra.mxu0 0.0
        %496 = vmatprep.subr.mxu0 0.0
        %497 = vmatpush1.msra.mxu0 0.0
        %498 = vmatprep.subr.mxu0 0.0
        %499 = vmatpush1.msra.mxu0 0.0
        %500 = vmatprep.subr.mxu0 0.0
        %501 = vmatpush1.msra.mxu0 0.0
        %502 = vmatprep.subr.mxu0 0.0
        %503 = vmatpush1.msra.mxu0 0.0
        %504 = vmatprep.subr.mxu0 0.0
        %505 = vmatpush1.msra.mxu0 0.0
        %506 = vmatprep.subr.mxu0 0.0
        %507 = vmatpush1.msra.mxu0 0.0
        %508 = vmatprep.mubr.f32.mxu0 0.0
        %509 = vmatmul.mubr.f32.gmra.mrb[0].mxu0 %v362
        %v510 = vpop.f32.mrb[0].mxu0
        %v511 = vadd.f32 0.0, %v510
        %v512 = vpop.f32.mrb[0].mxu0
        %513 = vmatprep.mubr.f32.mxu0 0.0
        %514 = vmatmul.mubr.f32.gmra.mrb[0].mxu0 %v365
        %v515 = vpop.f32.mrb[0].mxu0
        %v516 = vadd.f32 0.0, %v515
        %v517 = vpop.f32.mrb[0].mxu0
        %518 = vdwg.mxu0
        %s519 = scalar_lea.vmem %s216, 16 [#allocation8]
        %520 = vst.msk [vmem:[%s519] sm:$0xff] %vm231, %v511
        %521 = vst.msk [vmem:[%s519 + $0x8] sm:$0xff] %vm231, %v516
        %522 = vmatprep.subr.mxu0 0.0
        %523 = vmatpush1.msra.mxu0 %v343
        %524 = vmatprep.subr.mxu0 0.0
        %525 = vmatpush1.msra.mxu0 %v348
        %526 = vmatprep.subr.mxu0 0.0
        %527 = vmatpush1.msra.mxu0 0.0
        %528 = vmatprep.subr.mxu0 0.0
        %529 = vmatpush1.msra.mxu0 0.0
        %530 = vmatprep.subr.mxu0 0.0
        %531 = vmatpush1.msra.mxu0 0.0
        %532 = vmatprep.subr.mxu0 0.0
        %533 = vmatpush1.msra.mxu0 0.0
        %534 = vmatprep.subr.mxu0 0.0
        %535 = vmatpush1.msra.mxu0 0.0
        %536 = vmatprep.subr.mxu0 0.0
        %537 = vmatpush1.msra.mxu0 0.0
        %538 = vmatprep.subr.mxu0 0.0
        %539 = vmatpush1.msra.mxu0 0.0
        %540 = vmatprep.subr.mxu0 0.0
        %541 = vmatpush1.msra.mxu0 0.0
        %542 = vmatprep.subr.mxu0 0.0
        %543 = vmatpush1.msra.mxu0 0.0
        %544 = vmatprep.subr.mxu0 0.0
        %545 = vmatpush1.msra.mxu0 0.0
        %546 = vmatprep.subr.mxu0 0.0
        %547 = vmatpush1.msra.mxu0 0.0
        %548 = vmatprep.subr.mxu0 0.0
        %549 = vmatpush1.msra.mxu0 0.0
        %550 = vmatprep.subr.mxu0 0.0
        %551 = vmatpush1.msra.mxu0 0.0
        %552 = vmatprep.subr.mxu0 0.0
        %553 = vmatpush1.msra.mxu0 0.0
        %554 = vmatprep.subr.mxu0 0.0
        %555 = vmatpush1.msra.mxu0 0.0
        %556 = vmatprep.subr.mxu0 0.0
        %557 = vmatpush1.msra.mxu0 0.0
        %558 = vmatprep.subr.mxu0 0.0
        %559 = vmatpush1.msra.mxu0 0.0
        %560 = vmatprep.subr.mxu0 0.0
        %561 = vmatpush1.msra.mxu0 0.0
        %562 = vmatprep.subr.mxu0 0.0
        %563 = vmatpush1.msra.mxu0 0.0
        %564 = vmatprep.subr.mxu0 0.0
        %565 = vmatpush1.msra.mxu0 0.0
        %566 = vmatprep.subr.mxu0 0.0
        %567 = vmatpush1.msra.mxu0 0.0
        %568 = vmatprep.subr.mxu0 0.0
        %569 = vmatpush1.msra.mxu0 0.0
        %570 = vmatprep.subr.mxu0 0.0
        %571 = vmatpush1.msra.mxu0 0.0
        %572 = vmatprep.subr.mxu0 0.0
        %573 = vmatpush1.msra.mxu0 0.0
        %574 = vmatprep.subr.mxu0 0.0
        %575 = vmatpush1.msra.mxu0 0.0
        %576 = vmatprep.subr.mxu0 0.0
        %577 = vmatpush1.msra.mxu0 0.0
        %578 = vmatprep.subr.mxu0 0.0
        %579 = vmatpush1.msra.mxu0 0.0
        %580 = vmatprep.subr.mxu0 0.0
        %581 = vmatpush1.msra.mxu0 0.0
        %582 = vmatprep.subr.mxu0 0.0
        %583 = vmatpush1.msra.mxu0 0.0
        %584 = vmatprep.subr.mxu0 0.0
        %585 = vmatpush1.msra.mxu0 0.0
        %586 = vmatprep.mubr.f32.mxu0 0.0
        %587 = vmatmul.mubr.f32.gmra.mrb[0].mxu0 %v362
        %v588 = vpop.f32.mrb[0].mxu0
        %v589 = vadd.f32 0.0, %v588
        %v590 = vpop.f32.mrb[0].mxu0
        %591 = vmatprep.mubr.f32.mxu0 0.0
        %592 = vmatmul.mubr.f32.gmra.mrb[0].mxu0 %v365
        %v593 = vpop.f32.mrb[0].mxu0
        %v594 = vadd.f32 0.0, %v593
        %v595 = vpop.f32.mrb[0].mxu0
        %596 = vdwg.mxu0
        %s597 = scalar_lea.vmem %s216, 32 [#allocation8]
        %598 = vst.msk [vmem:[%s597] sm:$0xff] %vm231, %v589
        %599 = vst.msk [vmem:[%s597 + $0x8] sm:$0xff] %vm231, %v594
        %600 = vmatprep.subr.mxu0 0.0
        %601 = vmatpush1.msra.mxu0 %v353
        %602 = vmatprep.subr.mxu0 0.0
        %603 = vmatpush1.msra.mxu0 %v358
        %604 = vmatprep.subr.mxu0 0.0
        %605 = vmatpush1.msra.mxu0 0.0
        %606 = vmatprep.subr.mxu0 0.0
        %607 = vmatpush1.msra.mxu0 0.0
        %608 = vmatprep.subr.mxu0 0.0
        %609 = vmatpush1.msra.mxu0 0.0
        %610 = vmatprep.subr.mxu0 0.0
        %611 = vmatpush1.msra.mxu0 0.0
        %612 = vmatprep.subr.mxu0 0.0
        %613 = vmatpush1.msra.mxu0 0.0
        %614 = vmatprep.subr.mxu0 0.0
        %615 = vmatpush1.msra.mxu0 0.0
        %616 = vmatprep.subr.mxu0 0.0
        %617 = vmatpush1.msra.mxu0 0.0
        %618 = vmatprep.subr.mxu0 0.0
        %619 = vmatpush1.msra.mxu0 0.0
        %620 = vmatprep.subr.mxu0 0.0
        %621 = vmatpush1.msra.mxu0 0.0
        %622 = vmatprep.subr.mxu0 0.0
        %623 = vmatpush1.msra.mxu0 0.0
        %624 = vmatprep.subr.mxu0 0.0
        %625 = vmatpush1.msra.mxu0 0.0
        %626 = vmatprep.subr.mxu0 0.0
        %627 = vmatpush1.msra.mxu0 0.0
        %628 = vmatprep.subr.mxu0 0.0
        %629 = vmatpush1.msra.mxu0 0.0
        %630 = vmatprep.subr.mxu0 0.0
        %631 = vmatpush1.msra.mxu0 0.0
        %632 = vmatprep.subr.mxu0 0.0
        %633 = vmatpush1.msra.mxu0 0.0
        %634 = vmatprep.subr.mxu0 0.0
        %635 = vmatpush1.msra.mxu0 0.0
        %636 = vmatprep.subr.mxu0 0.0
        %637 = vmatpush1.msra.mxu0 0.0
        %638 = vmatprep.subr.mxu0 0.0
        %639 = vmatpush1.msra.mxu0 0.0
        %640 = vmatprep.subr.mxu0 0.0
        %641 = vmatpush1.msra.mxu0 0.0
        %642 = vmatprep.subr.mxu0 0.0
        %643 = vmatpush1.msra.mxu0 0.0
        %644 = vmatprep.subr.mxu0 0.0
        %645 = vmatpush1.msra.mxu0 0.0
        %646 = vmatprep.subr.mxu0 0.0
        %647 = vmatpush1.msra.mxu0 0.0
        %648 = vmatprep.subr.mxu0 0.0
        %649 = vmatpush1.msra.mxu0 0.0
        %650 = vmatprep.subr.mxu0 0.0
        %651 = vmatpush1.msra.mxu0 0.0
        %652 = vmatprep.subr.mxu0 0.0
        %653 = vmatpush1.msra.mxu0 0.0
        %654 = vmatprep.subr.mxu0 0.0
        %655 = vmatpush1.msra.mxu0 0.0
        %656 = vmatprep.subr.mxu0 0.0
        %657 = vmatpush1.msra.mxu0 0.0
        %658 = vmatprep.subr.mxu0 0.0
        %659 = vmatpush1.msra.mxu0 0.0
        %660 = vmatprep.subr.mxu0 0.0
        %661 = vmatpush1.msra.mxu0 0.0
        %662 = vmatprep.subr.mxu0 0.0
        %663 = vmatpush1.msra.mxu0 0.0
        %664 = vmatprep.mubr.f32.mxu0 0.0
        %665 = vmatmul.mubr.f32.gmra.mrb[0].mxu0 %v362
        %v666 = vpop.f32.mrb[0].mxu0
        %v667 = vadd.f32 0.0, %v666
        %v668 = vpop.f32.mrb[0].mxu0
        %669 = vmatprep.mubr.f32.mxu0 0.0
        %670 = vmatmul.mubr.f32.gmra.mrb[0].mxu0 %v365
        %v671 = vpop.f32.mrb[0].mxu0
        %v672 = vadd.f32 0.0, %v671
        %v673 = vpop.f32.mrb[0].mxu0
        %674 = vdwg.mxu0
        %s675 = scalar_lea.vmem %s216, 48 [#allocation8]
        %676 = vst.msk [vmem:[%s675] sm:$0xff] %vm231, %v667
        %677 = vst.msk [vmem:[%s675 + $0x8] sm:$0xff] %vm231, %v672
        %s678 = sand.u32 %s95, 1
        %s679 = scalar_lea.sflag [#allocation4], %s678
        %s680 = sand.u32 %s95, 1
        %s681 = smul.addr %s680, 64
        %s682 = scalar_lea.vmem [#allocation8], %s681
        // Predicated region
        $region45: #{tpu_custom_call.1} parent=31 // pred_check
          %p683 = pneg %p105
        $region46: #{tpu_custom_call.1} parent=31 // pred_check_branch
          %685 = sbr.rel (%p683) target = $region48
        $region47: #{tpu_custom_call.1} parent=31 // pred_region
          %s686 = smul.u32 4, %s19
          %s688 = ssub.s32 1024, 1024
          %689 = vsyncadd %s679, %s688
          %s690 = smul.addr %s686, 2
          %s691 = smul.addr %s690, 128
          %s692 = scalar_lea.hbm %s3, %s691
          %s693 = sshll.u32 %s682, 4
          %s694 = int_to_ptr.vmem [resolvable:$true] %s693
          %699 = dma.vmem_to_hbm [thread:$0]  %s694, 1024, %s692, %s679, 128, 128, 8
        $region48: #{tpu_custom_call.1} parent=31 // pred_fallthru
          _
      $region32: #{tpu_custom_call.1} parent=5 // pred_fallthru
        _
      %p700 = scmp.le.s32.totalorder 2, %s14
      // Predicated region
      $region49: #{tpu_custom_call.1} parent=5 // pred_check
        %p701 = pneg %p700
      $region50: #{tpu_custom_call.1} parent=5 // pred_check_branch
        %703 = sbr.rel (%p701) target = $region52
      $region51: #{tpu_custom_call.1} parent=5 // pred_region
        %s704 = ssub.s32 %s14, 2
        // Predicated region
        $region53: #{tpu_custom_call.1} parent=51 // pred_check
          %p705 = pneg %p111
        $region54: #{tpu_custom_call.1} parent=51 // pred_check_branch
          %707 = sbr.rel (%p705) target = $region56
        $region55: #{tpu_custom_call.1} parent=51 // pred_region
          %s708 = sand.u32 %s96, 1
          %s709 = scalar_lea.sflag [#allocation4], %s708
          %s710 = sand.u32 %s96, 1
          %s711 = smul.addr %s710, 64
          %s712 = scalar_lea.vmem [#allocation8], %s711
          %713 = dma.done %s709, 1024
        $region56: #{tpu_custom_call.1} parent=51 // pred_fallthru
          _
      $region52: #{tpu_custom_call.1} parent=5 // pred_fallthru
        _
    $region6: #{tpu_custom_call.1} parent=1 // loop_footer
      %s18 = sadd.s32 1, %s14
    $region7: #{tpu_custom_call.1} parent=1 // loop_footer_branch
      %13 = sbr.rel target = $region3
    $region8: #{tpu_custom_call.1} parent=1 // loop_exit
      _
    %714 = vsyncpa [#allocation3], 1
    %s715 = scalar_lea.sflag [#allocation3], 1
    %716 = vsyncpa %s715, 1
    %717 = vsyncpa [#allocation6], 1
    %718 = vsyncpa [#allocation4], 1
    %s719 = scalar_lea.sflag [#allocation4], 1
    %720 = vsyncpa %s719, 1

</llo_original>
